<compile_context>
chip_gen: v5e
topology: v5e:2x2
jax: 0.10.0
libtpu: 0.0.40
codegen_flags: <defaults>
</compile_context>

<pallas_src>
import jax
import jax.numpy as jnp
from jax.experimental import pallas as pl
from jax.experimental.pallas import tpu as pltpu


def _round_up(x, m):
    return ((x + m - 1) // m) * m


def _st_softmax_kernel(x_ref, o_ref):
    # x_ref / o_ref block shape: (TM, Hp); softmax/argmax over the last (lane) dim.
    x = x_ref[...]                                   # input dtype
    Hp = x.shape[-1]

    # Row max in the input dtype (also used for the argmax tie mask).
    m = jnp.max(x, axis=-1, keepdims=True)

    # Numerically stable softmax; exp/sum in f32.
    e = jnp.exp((x - m).astype(jnp.float32))
    s = jnp.sum(e, axis=-1, keepdims=True)
    p = e * pl.reciprocal(s, approx=True)            # EUP reciprocal + VPU broadcast-mul

    # First-occurrence argmax on the raw logits (softmax is monotonic).
    lane_iota = jax.lax.broadcasted_iota(jnp.int32, x.shape, dimension=x.ndim - 1)
    first_idx = jnp.min(
        jnp.where(x == m, lane_iota, jnp.int32(Hp)), axis=-1, keepdims=True
    )
    y_hard = (lane_iota == first_idx).astype(jnp.float32)

    # Straight-through combination (forward value).
    o_ref[...] = ((y_hard - p) + p).astype(o_ref.dtype)


def _choose_tm(rows_padded, hp, itemsize):
    # Sublane packing: 8 rows for 4-byte, 16 for 2-byte, 32 for 1-byte dtypes.
    sub = max(8, 32 // max(1, itemsize))
    # Keep double-buffered (in + out) tiles under ~16 MiB -> safe on v7x's 64 MiB
    # VMEM with headroom for in-kernel f32 intermediates.
    budget = 16 * 1024 * 1024
    tm = budget // (4 * hp * itemsize)               # 2 bufs x (in + out)
    tm = max(sub, (tm // sub) * sub)
    tm = min(tm, 512)                                # diminishing returns past ~512 rows
    tm = min(tm, _round_up(rows_padded, sub))        # small inputs: one tile
    return max(sub, tm)


def straight_through_softmax(logits):
    """logits: (B, S, H) array; softmax/argmax over the last dim."""
    B, S, H = logits.shape
    dtype = logits.dtype
    rows = B * S

    # Lane-dense last dim: pad H up to a multiple of 128 with a huge-negative
    # fill (softmax weight ~0, never selected by argmax).
    Hp = _round_up(H, 128)
    x2 = logits.reshape(rows, H)
    if Hp != H:
        neg = jnp.asarray(jnp.finfo(dtype).min, dtype)
        x2 = jnp.concatenate(
            [x2, jnp.full((rows, Hp - H), neg, dtype)], axis=1
        )

    TM = _choose_tm(rows, Hp, jnp.dtype(dtype).itemsize)
    rows_p = _round_up(rows, TM)
    if rows_p != rows:
        x2 = jnp.concatenate(
            [x2, jnp.zeros((rows_p - rows, Hp), dtype)], axis=0
        )

    out = pl.pallas_call(
        _st_softmax_kernel,
        out_shape=jax.ShapeDtypeStruct((rows_p, Hp), dtype),
        grid_spec=pltpu.PrefetchScalarGridSpec(
            num_scalar_prefetch=0,
            grid=(rows_p // TM,),
            in_specs=[pl.BlockSpec((TM, Hp), lambda i: (i, 0))],
            out_specs=pl.BlockSpec((TM, Hp), lambda i: (i, 0)),
        ),
        compiler_params=pltpu.CompilerParams(
            dimension_semantics=("parallel",),
            vmem_limit_bytes=48 * 1024 * 1024,
        ),
    )(x2)

    return out[:rows, :H].reshape(B, S, H)


if __name__ == "__main__":
    key = jax.random.PRNGKey(0)
    B, S, H = 2, 8, 32
    logits = jax.random.normal(key, (B, S, H), dtype=jnp.float32)

    out = straight_through_softmax(logits)
    out = jax.block_until_ready(out)

    # Self-check against a pure-JAX reference of the PyTorch forward.
    p_ref = jax.nn.softmax(logits, axis=-1)
    idx_ref = jnp.argmax(logits, axis=-1)       # argmax(softmax(x)) == argmax(x)
    y_hard_ref = jax.nn.one_hot(idx_ref, H, dtype=logits.dtype)
    ret_ref = (y_hard_ref - p_ref) + p_ref

    assert out.shape == (B, S, H)
    assert jnp.allclose(out, ret_ref, atol=1e-5), "mismatch vs reference"

    print("KERNEL_OK")
</pallas_src>

<mosaic_0001>
module attributes {stable_mosaic.version = 11 : i64} {
  func.func @_st_softmax_kernel(%arg0: i32, %arg1: memref<16x128xf32, #tpu.memory_space<vmem>>, %arg2: memref<16x128xf32, #tpu.memory_space<vmem>>) attributes {dimension_semantics = [#tpu.dimension_semantics<parallel>], iteration_bounds = array<i64: 1>, scalar_prefetch = 0 : i64, scratch_operands = 0 : i64, tpu.core_type = #tpu.core_type<tc>, window_params = [{transform_indices = @transform_0, window_bounds = array<i64: 16, 128>}, {transform_indices = @transform_1, window_bounds = array<i64: 16, 128>}]} {
    %c0 = arith.constant 0 : index
    %c0_0 = arith.constant 0 : index
    %0 = vector.load %arg1[%c0, %c0_0] : memref<16x128xf32, #tpu.memory_space<vmem>>, vector<16x128xf32>
    %cst = arith.constant dense<0xFF800000> : vector<16xf32>
    %1 = vector.multi_reduction <maximumf>, %0, %cst [1] : vector<16x128xf32> to vector<16xf32>
    %2 = vector.shape_cast %1 : vector<16xf32> to vector<16x1xf32>
    %3 = vector.broadcast %2 : vector<16x1xf32> to vector<16x128xf32>
    %4 = arith.subf %0, %3 : vector<16x128xf32>
    %5 = math.exp %4 : vector<16x128xf32>
    %cst_1 = arith.constant dense<0.000000e+00> : vector<16xf32>
    %6 = vector.multi_reduction <add>, %5, %cst_1 [1] : vector<16x128xf32> to vector<16xf32>
    %7 = vector.shape_cast %6 : vector<16xf32> to vector<16x1xf32>
    %8 = tpu.reciprocal %7 {approx = true} : vector<16x1xf32> -> vector<16x1xf32>
    %9 = vector.broadcast %8 : vector<16x1xf32> to vector<16x128xf32>
    %10 = arith.mulf %5, %9 : vector<16x128xf32>
    %11 = tpu.iota {dimensions = array<i32: 1>} : vector<16x128xi32>
    %12 = vector.broadcast %2 : vector<16x1xf32> to vector<16x128xf32>
    %13 = arith.cmpf oeq, %0, %12 : vector<16x128xf32>
    %c128_i32 = arith.constant 128 : i32
    %14 = vector.broadcast %c128_i32 : i32 to vector<16x128xi32>
    %15 = arith.select %13, %11, %14 : vector<16x128xi1>, vector<16x128xi32>
    %cst_2 = arith.constant dense<2147483647> : vector<16xi32>
    %16 = vector.multi_reduction <minsi>, %15, %cst_2 [1] : vector<16x128xi32> to vector<16xi32>
    %17 = vector.shape_cast %16 : vector<16xi32> to vector<16x1xi32>
    %18 = vector.broadcast %17 : vector<16x1xi32> to vector<16x128xi32>
    %19 = arith.cmpi eq, %11, %18 : vector<16x128xi32>
    %20 = arith.extui %19 : vector<16x128xi1> to vector<16x128xi32>
    %21 = arith.sitofp %20 : vector<16x128xi32> to vector<16x128xf32>
    %22 = arith.subf %21, %10 : vector<16x128xf32>
    %23 = arith.addf %22, %10 : vector<16x128xf32>
    %c0_3 = arith.constant 0 : index
    %c0_4 = arith.constant 0 : index
    %24 = vector.load %arg2[%c0_3, %c0_4] : memref<16x128xf32, #tpu.memory_space<vmem>>, vector<16x128xf32>
    tpu.vector_store %arg2[%c0_3, %c0_4], %23 {strides = array<i32>} : memref<16x128xf32, #tpu.memory_space<vmem>>, vector<16x128xf32>,
    return
  }
  func.func @transform_0(%arg0: i32) -> (i32, i32) {
    %c0_i32 = arith.constant 0 : i32
    %c0_i32_0 = arith.constant 0 : i32
    return %arg0, %c0_i32 : i32, i32
  }
  func.func @transform_1(%arg0: i32) -> (i32, i32) {
    %c0_i32 = arith.constant 0 : i32
    %c0_i32_0 = arith.constant 0 : i32
    return %arg0, %c0_i32 : i32, i32
  }
}

</mosaic_0001>

<llo_original>
// kernel: tpu_custom_call.1
$region0: #{tpu_custom_call.1}
  #allocation0 [shape = 'u32[]', space=smem, size = 0x4, offset = 0x4, fixed_abs, tag = 'smem constant byte address 0x4 - core index']
  #allocation1 [shape = 'u32[72,128]{1,0:T(1,128)}', space=vmem, size = 0x9000, scoped, tag = 'internal scratch']
  %s0 = inlined_call_operand.hbm [shape: f32[16,128], index: 0, kind: input, shape index: {}]
  %s1 = inlined_call_operand.hbm [shape: f32[16,128], index: 1, kind: output, shape index: {}]
  %s2 = sld [smem:[#allocation0]]
  $region18: #{tpu_custom_call.1} parent=0
    _
  %s4 = ssub.s32 1, %s2
  %s5 = scalar_select 0, %s4, %s2
  $region1: #{tpu_custom_call.1} parent=0
    #allocation2 [shape = 'u8[8192]{0}', space=vmem, size = 0x2000, scoped, tag = 'input window, operand 0, single buffered']
    #allocation3 [shape = 's32[1]{0}', space=sflag, size = 0x4, scoped, tag = 'scoped memory for tpu_custom_call.1']
    #allocation4 [shape = 's32[1]{0}', space=sflag, size = 0x4, scoped, tag = 'scoped memory for tpu_custom_call.1']
    #allocation5 [shape = 'u8[8192]{0}', space=vmem, size = 0x2000, scoped, tag = 'output window, operand 0, single buffered']
    %6 = vsyncpa [#allocation3], 0
    %7 = vsyncpa [#allocation4], 0
    // Predicated region
    $region2: #{tpu_custom_call.1} parent=1 // pred_check
      _
    $region3: #{tpu_custom_call.1} parent=1 // pred_check_branch
      %9 = sbr.rel (0) target = $region5
    $region4: #{tpu_custom_call.1} parent=1 // pred_region
      %11 = vsyncadd [#allocation3], 0
      %s12 = sshll.u32 %s0, 4
      %s13 = int_to_ptr.hbm [resolvable:$true] %s12
      %s14 = sshll.u32 [#allocation2], 4
      %s15 = int_to_ptr.vmem [resolvable:$true] %s14
      %20 = dma.hbm_to_vmem [thread:$0]  %s13, 256, %s15, [#allocation3], 128, 128, 8
    $region5: #{tpu_custom_call.1} parent=1 // pred_fallthru
      _
    // Predicated region
    $region6: #{tpu_custom_call.1} parent=1 // pred_check
      _
    $region7: #{tpu_custom_call.1} parent=1 // pred_check_branch
      %22 = sbr.rel (0) target = $region9
    $region8: #{tpu_custom_call.1} parent=1 // pred_region
      %24 = dma.done [#allocation3], 256
    $region9: #{tpu_custom_call.1} parent=1 // pred_fallthru
      _
    %v25 = vld [vmem:[#allocation2] sm:$0xff]
    %v26 = vld [vmem:[#allocation2 + $0x8] sm:$0xff]
    %27 = vmax.xlane.f32.xlu0 %v25
    %v28 = vpop.xlane.xlu0 %27
    %29 = vmax.xlane.f32.xlu0 %v26
    %v30 = vpop.xlane.xlu0 %29
    %v31 = vsub.f32 %v25, %v28
    %v32 = vsub.f32 %v26, %v30
    %v33 = vmul.f32 %v31, 1.442695
    %v34 = vpow.pop %v33
    %v35 = vmul.f32 %v32, 1.442695
    %v36 = vpow.pop %v35
    %37 = vadd.xlane.f32.xlu0 %v34
    %v38 = vpop.xlane.xlu0 %37
    %39 = vadd.xlane.f32.xlu0 %v36
    %v40 = vpop.xlane.xlu0 %39
    %v41 = vrcp.pop %v38
    %v42 = vrcp.pop %v40
    %v43 = vmul.f32 %v34, %v41
    %v44 = vmul.f32 %v36, %v42
    %v45 = vlaneseq
    %v46 = vand.u32 %v45, 127
    %vm47 = vcmp.eq.f32.partialorder %v25, %v28
    %vm48 = vcmp.eq.f32.partialorder %v26, %v30
    %v49 = vsel %vm47, %v46, 128
    %v50 = vsel %vm48, %v46, 128
    %v51 = vand.u32 %v49, 65535
    %v52 = vshra.s32 %v49, 16
    %v53 = vcvt.s32.f32 %v51
    %v54 = vcvt.s32.f32 %v52
    %55 = vmin.xlane.f32.xlu0 %v54
    %v56 = vpop.xlane.xlu0 %55
    %vm57 = vcmp.eq.f32.partialorder %v54, %v56
    %v58 = vsel %vm57, %v53, inf
    %59 = vmin.xlane.f32.xlu0 %v58
    %v60 = vpop.xlane.xlu0 %59
    %v61 = vcvt.f32.s32 %v60
    %v62 = vcvt.f32.s32 %v56
    %v63 = vshll.u32 %v62, 16
    %v64 = vadd.s32 %v63, %v61
    %v65 = vand.u32 %v50, 65535
    %v66 = vshra.s32 %v50, 16
    %v67 = vcvt.s32.f32 %v65
    %v68 = vcvt.s32.f32 %v66
    %69 = vmin.xlane.f32.xlu0 %v68
    %v70 = vpop.xlane.xlu0 %69
    %vm71 = vcmp.eq.f32.partialorder %v68, %v70
    %v72 = vsel %vm71, %v67, inf
    %73 = vmin.xlane.f32.xlu0 %v72
    %v74 = vpop.xlane.xlu0 %73
    %v75 = vcvt.f32.s32 %v74
    %v76 = vcvt.f32.s32 %v70
    %v77 = vshll.u32 %v76, 16
    %v78 = vadd.s32 %v77, %v75
    %vm79 = vcmp.eq.s32.totalorder %v46, %v64
    %vm80 = vcmp.eq.s32.totalorder %v46, %v78
    %v81 = vsel %vm79, 1, 0
    %v82 = vsel %vm80, 1, 0
    %v83 = vcvt.s32.f32 %v81
    %v84 = vcvt.s32.f32 %v82
    %v85 = vsub.f32 %v83, %v43
    %v86 = vsub.f32 %v84, %v44
    %v87 = vadd.f32 %v85, %v43
    %v88 = vadd.f32 %v86, %v44
    %89 = vst [vmem:[#allocation5] sm:$0xff] %v87
    %90 = vst [vmem:[#allocation5 + $0x8] sm:$0xff] %v88
    // Predicated region
    $region10: #{tpu_custom_call.1} parent=1 // pred_check
      _
    $region11: #{tpu_custom_call.1} parent=1 // pred_check_branch
      %92 = sbr.rel (0) target = $region13
    $region12: #{tpu_custom_call.1} parent=1 // pred_region
      %94 = vsyncadd [#allocation4], 0
      %s95 = sshll.u32 [#allocation5], 4
      %s96 = int_to_ptr.vmem [resolvable:$true] %s95
      %s97 = sshll.u32 %s1, 4
      %s98 = int_to_ptr.hbm [resolvable:$true] %s97
      %103 = dma.vmem_to_hbm [thread:$0]  %s96, 256, %s98, [#allocation4], 128, 128, 8
    $region13: #{tpu_custom_call.1} parent=1 // pred_fallthru
      _
    // Predicated region
    $region14: #{tpu_custom_call.1} parent=1 // pred_check
      _
    $region15: #{tpu_custom_call.1} parent=1 // pred_check_branch
      %105 = sbr.rel (0) target = $region17
    $region16: #{tpu_custom_call.1} parent=1 // pred_region
      %107 = dma.done [#allocation4], 256
    $region17: #{tpu_custom_call.1} parent=1 // pred_fallthru
      _
    %108 = vsyncpa [#allocation3], 1
    %109 = vsyncpa [#allocation4], 1

</llo_original>
